<compile_context>
chip_gen: v7x
topology: tpu7x:2x2x1
jax: 0.10.0
libtpu: 0.0.40
codegen_flags: <defaults>
</compile_context>

<pallas_src>
import functools

import jax
import jax.numpy as jnp
from jax import lax
from jax.experimental import pallas as pl
from jax.experimental.pallas import tpu as pltpu


def _round_up(x, m):
    return ((x + m - 1) // m) * m


def _vmem_limit_bytes():
    """Generation-aware scoped-VMEM budget (v7x: 64 MiB physical/TC; v5e/v6e: 128 MiB)."""
    try:
        info = pltpu.get_tpu_info()
        cap = getattr(info, "vmem_capacity_bytes", None)
        if cap:
            return int(min(0.85 * cap, 110 * 1024 * 1024))
    except Exception:
        pass
    return 64 * 1024 * 1024


def _graphsage_kernel(adj_ref, self_ref, invdeg_ref, feats_ref,
                      wself_ref, wneigh_ref, wcls_ref, out_ref):
    """Fused GraphSAGE forward for one batch tile.

    adj_ref    : (TB, N)     raw {0,1} neighbor mask tile (narrow dtype stream)
    self_ref   : (TB, F)     gathered self features (f32, pipelined from the wrapper)
    invdeg_ref : (TB, 1)     exact 1/max(deg,1) per batch row
    feats_ref  : (N, F)      full feature table (resident in VMEM)
    wself_ref  : (F, E)      encoder weight, self half (W_enc[:, :F].T)
    wneigh_ref : (F, E)      encoder weight, neighbor half (W_enc[:, F:].T)
    wcls_ref   : (E, C_pad)  classifier weight, W_cls.T zero-padded to 128 lanes
    out_ref    : (TB, C_pad) scores.t() tile (lane-dense unmasked store)
    """
    # --- MeanAggregator: aggregate the raw {0,1} mask on the MXU, then normalize the
    #     small (TB, F) result with the exact per-row reciprocal from the wrapper.
    adj = adj_ref[...].astype(feats_ref.dtype)              # VPU cast (bf16 stream -> matmul dtype)
    neigh = jnp.dot(adj, feats_ref[...],
                    preferred_element_type=jnp.float32)     # (TB, F) f32
    neigh = neigh * invdeg_ref[...]                         # (TB, 1) broadcast, exact

    # --- Encoder (gcn=False): two accumulating MXU dots instead of a lane-axis concat
    #     (F is not a multiple of 128, so concat would force an XLU relayout + copy).
    h = jnp.dot(self_ref[...], wself_ref[...],
                preferred_element_type=jnp.float32)          # (TB, E)
    h = h + jnp.dot(neigh.astype(wneigh_ref.dtype), wneigh_ref[...],
                    preferred_element_type=jnp.float32)
    embeds = jnp.maximum(h, 0.0)                             # relu

    # --- Classifier head; C padded to 128 lanes -> unmasked lane-dense vst.
    out_ref[...] = jnp.dot(embeds, wcls_ref[...],
                           preferred_element_type=jnp.float32)


def prepare_params(w_enc, w_cls, *, lane=128, dtype=jnp.float32):
    """One-time weight prep, hoisted out of the per-call forward path.

    w_enc : (E, 2F) PyTorch encoder weight  -> (W_self (F,E), W_neigh (F,E))
    w_cls : (C, E)  PyTorch classifier weight -> (E, C_pad) zero-padded on the lane axis
    """
    w_enc = jnp.asarray(w_enc, dtype)
    E, two_f = w_enc.shape
    F = two_f // 2
    w_self_t = w_enc[:, :F].T                               # (F, E) self half
    w_neigh_t = w_enc[:, F:].T                              # (F, E) neighbor half
    C, E2 = w_cls.shape
    assert E2 == E
    c_pad = _round_up(max(C, 1), lane)
    w_cls_t_pad = jnp.zeros((E, c_pad), dtype).at[:, :C].set(jnp.asarray(w_cls, dtype).T)
    return w_self_t, w_neigh_t, w_cls_t_pad


def supervised_graphsage_forward(nodes, adj_mask, feats, w_self_t, w_neigh_t,
                                 w_cls_t_pad, num_classes, *, batch_tile=None,
                                 agg_dtype=jnp.float32, adj_dtype=jnp.bfloat16):
    """Runs the fused Pallas kernel.

    nodes       : (B,)   int32 node ids
    adj_mask    : (B, N) float {0,1} neighbor indicator for each batch node
    feats       : (N, F) feature table
    w_self_t    : (F, E)     from prepare_params
    w_neigh_t   : (F, E)     from prepare_params
    w_cls_t_pad : (E, C_pad) from prepare_params
    returns     : (B, num_classes) scores.t()
    """
    B = nodes.shape[0]
    N, F = feats.shape
    E = w_self_t.shape[1]
    C_pad = w_cls_t_pad.shape[1]

    # --- Batch tiling. Guarantee >= 2 grid steps when B >= 16 so the "parallel" batch
    #     axis can actually be split across v7x's two TensorCores.
    if batch_tile is None:
        if B <= 8:
            TB = B
        else:
            TB = min(512, _round_up(B, 8))
            if B >= 16:
                TB = min(TB, _round_up(pl.cdiv(B, 2), 8))
    else:
        TB = batch_tile
    B_pad = _round_up(B, TB)
    grid = (B_pad // TB,)

    # --- Wrapper-side prep: self-feature gather (pipelined input instead of an in-kernel
    #     scalar gather loop), exact per-row inverse degree, fused pad+cast of adj.
    nodes32 = nodes.astype(jnp.int32)
    self_feats = feats[nodes32].astype(jnp.float32)                         # (B, F), kept f32
    inv_deg = 1.0 / jnp.maximum(
        adj_mask.astype(jnp.float32).sum(axis=1, keepdims=True), 1.0)       # (B, 1) exact
    # NOTE: zero-neighbor rows are clamped to deg>=1 (PyTorch's MeanAggregator would
    # divide by zero) -- documented deviation: such rows get a zero neighbor vector.

    if B_pad != B:
        pad = ((0, B_pad - B), (0, 0))
        adj = jnp.pad(adj_mask, pad).astype(adj_dtype)
        self_feats = jnp.pad(self_feats, pad)
        inv_deg = jnp.pad(inv_deg, pad)
    else:
        adj = adj_mask.astype(adj_dtype)
    feats_c = feats.astype(agg_dtype)

    flops = (2 * B_pad * N * F            # aggregation
             + 2 * B_pad * F * E * 2      # encoder (two K=F dots)
             + 2 * B_pad * E * C_pad)     # classifier
    bytes_accessed = (adj.size * adj.dtype.itemsize
                      + self_feats.size * self_feats.dtype.itemsize
                      + inv_deg.size * inv_deg.dtype.itemsize
                      + feats_c.size * feats_c.dtype.itemsize
                      + w_self_t.size * w_self_t.dtype.itemsize
                      + w_neigh_t.size * w_neigh_t.dtype.itemsize
                      + w_cls_t_pad.size * w_cls_t_pad.dtype.itemsize
                      + B_pad * C_pad * 4)

    scores_pad = pl.pallas_call(
        _graphsage_kernel,
        out_shape=jax.ShapeDtypeStruct((B_pad, C_pad), jnp.float32),
        grid_spec=pltpu.PrefetchScalarGridSpec(
            num_scalar_prefetch=0,
            grid=grid,
            in_specs=[
                pl.BlockSpec((TB, N), lambda i: (i, 0)),          # adj mask tile (streamed)
                pl.BlockSpec((TB, F), lambda i: (i, 0)),          # self features (streamed)
                pl.BlockSpec((TB, 1), lambda i: (i, 0)),          # exact 1/deg (streamed)
                pl.BlockSpec((N, F), lambda i: (0, 0)),           # feature table (resident)
                pl.BlockSpec((F, E), lambda i: (0, 0)),           # W_self (resident)
                pl.BlockSpec((F, E), lambda i: (0, 0)),           # W_neigh (resident)
                pl.BlockSpec((E, C_pad), lambda i: (0, 0)),       # W_cls.T padded (resident)
            ],
            out_specs=pl.BlockSpec((TB, C_pad), lambda i: (i, 0)),
            scratch_shapes=[],
        ),
        compiler_params=pltpu.CompilerParams(
            dimension_semantics=("parallel",),
            vmem_limit_bytes=_vmem_limit_bytes(),
        ),
        cost_estimate=pl.CostEstimate(
            flops=flops, transcendentals=0, bytes_accessed=bytes_accessed),
    )(adj, self_feats, inv_deg, feats_c, w_self_t, w_neigh_t, w_cls_t_pad)

    return scores_pad[:B, :num_classes]


def _xavier_uniform(key, shape):
    fan_out, fan_in = shape
    bound = jnp.sqrt(6.0 / (fan_in + fan_out))
    return jax.random.uniform(key, shape, jnp.float32, -bound, bound)


def _reference(nodes, adj_mask, feats, w_enc, w_cls):
    hp = lax.Precision.HIGHEST
    self_feats = feats[nodes]
    deg = jnp.maximum(adj_mask.sum(axis=1, keepdims=True), 1.0)
    neigh = jnp.dot(adj_mask, feats, precision=hp) / deg
    combined = jnp.concatenate([self_feats, neigh], axis=1)    # (B, 2F)
    embeds = jnp.maximum(jnp.dot(w_enc, combined.T, precision=hp), 0.0)   # (E, B)
    return jnp.dot(w_cls, embeds, precision=hp).T                          # (B, C)


if __name__ == "__main__":
    NUM_NODES = 64      # graph size N
    FEAT_DIM = 16       # raw feature dim F
    EMBED_DIM = 32      # enc.embed_dim E
    NUM_CLASSES = 7     # C
    BATCH = 8           # len(nodes)

    key = jax.random.PRNGKey(0)
    k_feat, k_adj, k_enc, k_cls, k_nodes, k_adj2, k_nodes2 = jax.random.split(key, 7)

    feats = jax.random.normal(k_feat, (NUM_NODES, FEAT_DIM), jnp.float32)
    adj_mask = (jax.random.uniform(k_adj, (BATCH, NUM_NODES)) < 0.2).astype(jnp.float32)
    adj_mask = adj_mask.at[:, 0].set(1.0)   # guarantee >= 1 neighbor per batch node

    w_enc = _xavier_uniform(k_enc, (EMBED_DIM, 2 * FEAT_DIM))   # (E, 2F), PyTorch layout
    w_cls = _xavier_uniform(k_cls, (NUM_CLASSES, EMBED_DIM))    # (C, E),  PyTorch layout
    nodes = jax.random.randint(k_nodes, (BATCH,), 0, NUM_NODES, jnp.int32)

    # One-time parameter prep (split/transpose/lane-pad hoisted out of forward).
    w_self_t, w_neigh_t, w_cls_t_pad = prepare_params(w_enc, w_cls)

    scores = supervised_graphsage_forward(nodes, adj_mask, feats,
                                          w_self_t, w_neigh_t, w_cls_t_pad, NUM_CLASSES)
    scores = jax.block_until_ready(scores)

    ref = _reference(nodes, adj_mask, feats, w_enc, w_cls)
    assert scores.shape == (BATCH, NUM_CLASSES)
    assert bool(jnp.all(jnp.isfinite(scores)))
    # Exact degree normalization (no approx reciprocal) -> tolerance tightened vs. before.
    assert jnp.allclose(scores, ref, atol=5e-3, rtol=5e-3), \
        float(jnp.max(jnp.abs(scores - ref)))

    # Second check: exercise the gridded (multi-tile) batch path + the parallel axis.
    BATCH2 = 24
    adj2 = (jax.random.uniform(k_adj2, (BATCH2, NUM_NODES)) < 0.2).astype(jnp.float32)
    adj2 = adj2.at[:, 0].set(1.0)
    nodes2 = jax.random.randint(k_nodes2, (BATCH2,), 0, NUM_NODES, jnp.int32)
    scores2 = supervised_graphsage_forward(nodes2, adj2, feats,
                                           w_self_t, w_neigh_t, w_cls_t_pad, NUM_CLASSES,
                                           batch_tile=8)
    scores2 = jax.block_until_ready(scores2)
    ref2 = _reference(nodes2, adj2, feats, w_enc, w_cls)
    assert scores2.shape == (BATCH2, NUM_CLASSES)
    assert jnp.allclose(scores2, ref2, atol=5e-3, rtol=5e-3), \
        float(jnp.max(jnp.abs(scores2 - ref2)))

    print("KERNEL_OK")
</pallas_src>

<mosaic_0001>
module attributes {stable_mosaic.version = 11 : i64} {
  func.func @_graphsage_kernel(%arg0: i32, %arg1: memref<8x64xbf16, #tpu.memory_space<vmem>>, %arg2: memref<8x16xf32, #tpu.memory_space<vmem>>, %arg3: memref<8x1xf32, #tpu.memory_space<vmem>>, %arg4: memref<64x16xf32, #tpu.memory_space<vmem>>, %arg5: memref<16x32xf32, #tpu.memory_space<vmem>>, %arg6: memref<16x32xf32, #tpu.memory_space<vmem>>, %arg7: memref<32x128xf32, #tpu.memory_space<vmem>>, %arg8: memref<8x128xf32, #tpu.memory_space<vmem>>) attributes {dimension_semantics = [#tpu.dimension_semantics<parallel>], iteration_bounds = array<i64: 1>, scalar_prefetch = 0 : i64, scratch_operands = 0 : i64, tpu.core_type = #tpu.core_type<tc>, window_params = [{transform_indices = @transform_0, window_bounds = array<i64: 8, 64>}, {transform_indices = @transform_1, window_bounds = array<i64: 8, 16>}, {transform_indices = @transform_2, window_bounds = array<i64: 8, 1>}, {pipeline_mode = #tpu.pipeline_mode<synchronous>, transform_indices = @transform_3, window_bounds = array<i64: 64, 16>}, {pipeline_mode = #tpu.pipeline_mode<synchronous>, transform_indices = @transform_4, window_bounds = array<i64: 16, 32>}, {pipeline_mode = #tpu.pipeline_mode<synchronous>, transform_indices = @transform_5, window_bounds = array<i64: 16, 32>}, {pipeline_mode = #tpu.pipeline_mode<synchronous>, transform_indices = @transform_6, window_bounds = array<i64: 32, 128>}, {transform_indices = @transform_7, window_bounds = array<i64: 8, 128>}]} {
    %c0 = arith.constant 0 : index
    %c0_0 = arith.constant 0 : index
    %0 = vector.load %arg1[%c0, %c0_0] : memref<8x64xbf16, #tpu.memory_space<vmem>>, vector<8x64xbf16>
    %1 = arith.extf %0 : vector<8x64xbf16> to vector<8x64xf32>
    %c0_1 = arith.constant 0 : index
    %c0_2 = arith.constant 0 : index
    %2 = vector.load %arg4[%c0_1, %c0_2] : memref<64x16xf32, #tpu.memory_space<vmem>>, vector<64x16xf32>
    %cst = arith.constant dense<0.000000e+00> : vector<8x16xf32>
    %3 = tpu.matmul %1, %2, %cst {dimension_numbers = #tpu.dot_dimension_numbers<[1], [0], [0], [1], [0, 0, 1, 1], [], []>} : vector<8x64xf32>, vector<64x16xf32>, vector<8x16xf32> -> vector<8x16xf32>
    %c0_3 = arith.constant 0 : index
    %c0_4 = arith.constant 0 : index
    %4 = vector.load %arg3[%c0_3, %c0_4] : memref<8x1xf32, #tpu.memory_space<vmem>>, vector<8x1xf32>
    %5 = vector.broadcast %4 : vector<8x1xf32> to vector<8x16xf32>
    %6 = arith.mulf %3, %5 : vector<8x16xf32>
    %c0_5 = arith.constant 0 : index
    %c0_6 = arith.constant 0 : index
    %7 = vector.load %arg2[%c0_5, %c0_6] : memref<8x16xf32, #tpu.memory_space<vmem>>, vector<8x16xf32>
    %c0_7 = arith.constant 0 : index
    %c0_8 = arith.constant 0 : index
    %8 = vector.load %arg5[%c0_7, %c0_8] : memref<16x32xf32, #tpu.memory_space<vmem>>, vector<16x32xf32>
    %cst_9 = arith.constant dense<0.000000e+00> : vector<8x32xf32>
    %9 = tpu.matmul %7, %8, %cst_9 {dimension_numbers = #tpu.dot_dimension_numbers<[1], [0], [0], [1], [0, 0, 1, 1], [], []>} : vector<8x16xf32>, vector<16x32xf32>, vector<8x32xf32> -> vector<8x32xf32>
    %c0_10 = arith.constant 0 : index
    %c0_11 = arith.constant 0 : index
    %10 = vector.load %arg6[%c0_10, %c0_11] : memref<16x32xf32, #tpu.memory_space<vmem>>, vector<16x32xf32>
    %cst_12 = arith.constant dense<0.000000e+00> : vector<8x32xf32>
    %11 = tpu.matmul %6, %10, %cst_12 {dimension_numbers = #tpu.dot_dimension_numbers<[1], [0], [0], [1], [0, 0, 1, 1], [], []>} : vector<8x16xf32>, vector<16x32xf32>, vector<8x32xf32> -> vector<8x32xf32>
    %12 = arith.addf %9, %11 : vector<8x32xf32>
    %cst_13 = arith.constant 0.000000e+00 : f32
    %13 = vector.broadcast %cst_13 : f32 to vector<8x32xf32>
    %14 = arith.maximumf %12, %13 : vector<8x32xf32>
    %c0_14 = arith.constant 0 : index
    %c0_15 = arith.constant 0 : index
    %15 = vector.load %arg7[%c0_14, %c0_15] : memref<32x128xf32, #tpu.memory_space<vmem>>, vector<32x128xf32>
    %cst_16 = arith.constant dense<0.000000e+00> : vector<8x128xf32>
    %16 = tpu.matmul %14, %15, %cst_16 {dimension_numbers = #tpu.dot_dimension_numbers<[1], [0], [0], [1], [0, 0, 1, 1], [], []>} : vector<8x32xf32>, vector<32x128xf32>, vector<8x128xf32> -> vector<8x128xf32>
    %c0_17 = arith.constant 0 : index
    %c0_18 = arith.constant 0 : index
    %17 = vector.load %arg8[%c0_17, %c0_18] : memref<8x128xf32, #tpu.memory_space<vmem>>, vector<8x128xf32>
    tpu.vector_store %arg8[%c0_17, %c0_18], %16 {strides = array<i32>} : memref<8x128xf32, #tpu.memory_space<vmem>>, vector<8x128xf32>,
    return
  }
  func.func @transform_0(%arg0: i32) -> (i32, i32) {
    %c0_i32 = arith.constant 0 : i32
    %c0_i32_0 = arith.constant 0 : i32
    return %arg0, %c0_i32 : i32, i32
  }
  func.func @transform_1(%arg0: i32) -> (i32, i32) {
    %c0_i32 = arith.constant 0 : i32
    %c0_i32_0 = arith.constant 0 : i32
    return %arg0, %c0_i32 : i32, i32
  }
  func.func @transform_2(%arg0: i32) -> (i32, i32) {
    %c0_i32 = arith.constant 0 : i32
    %c0_i32_0 = arith.constant 0 : i32
    return %arg0, %c0_i32 : i32, i32
  }
  func.func @transform_3(%arg0: i32) -> (i32, i32) {
    %c0_i32 = arith.constant 0 : i32
    %c0_i32_0 = arith.constant 0 : i32
    %c0_i32_1 = arith.constant 0 : i32
    return %c0_i32, %c0_i32_0 : i32, i32
  }
  func.func @transform_4(%arg0: i32) -> (i32, i32) {
    %c0_i32 = arith.constant 0 : i32
    %c0_i32_0 = arith.constant 0 : i32
    %c0_i32_1 = arith.constant 0 : i32
    return %c0_i32, %c0_i32_0 : i32, i32
  }
  func.func @transform_5(%arg0: i32) -> (i32, i32) {
    %c0_i32 = arith.constant 0 : i32
    %c0_i32_0 = arith.constant 0 : i32
    %c0_i32_1 = arith.constant 0 : i32
    return %c0_i32, %c0_i32_0 : i32, i32
  }
  func.func @transform_6(%arg0: i32) -> (i32, i32) {
    %c0_i32 = arith.constant 0 : i32
    %c0_i32_0 = arith.constant 0 : i32
    %c0_i32_1 = arith.constant 0 : i32
    return %c0_i32, %c0_i32_0 : i32, i32
  }
  func.func @transform_7(%arg0: i32) -> (i32, i32) {
    %c0_i32 = arith.constant 0 : i32
    %c0_i32_0 = arith.constant 0 : i32
    return %arg0, %c0_i32 : i32, i32
  }
}

</mosaic_0001>

<llo_original>
// kernel: tpu_custom_call.1
$region0: #{tpu_custom_call.1}
  #allocation0 [shape = 'u32[]', space=smem, size = 0x4, offset = 0x4, fixed_abs, tag = 'smem constant byte address 0x4 - core index']
  #allocation1 [shape = 'u32[144,128]{1,0:T(1,128)}', space=vmem, size = 0x12000, scoped, tag = 'internal scratch']
  %s0 = inlined_call_operand.hbm [shape: bf16[8,64], index: 0, kind: input, shape index: {}]
  %s1 = inlined_call_operand.hbm [shape: f32[8,16], index: 1, kind: input, shape index: {}]
  %s2 = inlined_call_operand.hbm [shape: f32[8,1], index: 2, kind: input, shape index: {}]
  %s3 = inlined_call_operand.hbm [shape: f32[64,16], index: 3, kind: input, shape index: {}]
  %s4 = inlined_call_operand.hbm [shape: f32[16,32], index: 4, kind: input, shape index: {}]
  %s5 = inlined_call_operand.hbm [shape: f32[16,32], index: 5, kind: input, shape index: {}]
  %s6 = inlined_call_operand.hbm [shape: f32[32,128], index: 6, kind: input, shape index: {}]
  %s7 = inlined_call_operand.hbm [shape: f32[8,128], index: 7, kind: output, shape index: {}]
  %s8 = sld [smem:[#allocation0]]
  $region66: #{tpu_custom_call.1} parent=0
    _
  %s10 = ssub.s32 1, %s8
  %s11 = scalar_select 0, %s10, %s8
  $region1: #{tpu_custom_call.1} parent=0
    #allocation2 [shape = 'u8[2048]{0}', space=vmem, size = 0x800, scoped, tag = 'input window, operand 0, single buffered']
    #allocation3 [shape = 's32[1]{0}', space=sflag, size = 0x4, scoped, tag = 'scoped memory for tpu_custom_call.1']
    #allocation4 [shape = 's32[1]{0}', space=sflag, size = 0x4, scoped, tag = 'scoped memory for tpu_custom_call.1']
    #allocation5 [shape = 'u8[4096]{0}', space=vmem, size = 0x1000, scoped, tag = 'input window, operand 1, single buffered']
    #allocation6 [shape = 's32[1]{0}', space=sflag, size = 0x4, scoped, tag = 'scoped memory for tpu_custom_call.1']
    #allocation7 [shape = 'u8[4096]{0}', space=vmem, size = 0x1000, scoped, tag = 'input window, operand 2, single buffered']
    #allocation8 [shape = 'u8[32768]{0}', space=vmem, size = 0x8000, scoped, tag = 'input window, operand 3, single buffered']
    #allocation9 [shape = 's32[1]{0}', space=sflag, size = 0x4, scoped, tag = 'scoped memory for tpu_custom_call.1']
    #allocation10 [shape = 'u8[8192]{0}', space=vmem, size = 0x2000, scoped, tag = 'input window, operand 4, single buffered']
    #allocation11 [shape = 'u8[8192]{0}', space=vmem, size = 0x2000, scoped, tag = 'input window, operand 5, single buffered']
    #allocation12 [shape = 's32[1]{0}', space=sflag, size = 0x4, scoped, tag = 'scoped memory for tpu_custom_call.1']
    #allocation13 [shape = 'u8[16384]{0}', space=vmem, size = 0x4000, scoped, tag = 'input window, operand 6, single buffered']
    #allocation14 [shape = 'u8[4096]{0}', space=vmem, size = 0x1000, scoped, tag = 'output window, operand 0, single buffered']
    %12 = vsyncpa [#allocation3], 0
    %13 = vsyncpa [#allocation6], 0
    %14 = vsyncpa [#allocation9], 0
    %15 = vsyncpa [#allocation12], 0
    %16 = vsyncpa [#allocation4], 0
    // Predicated region
    $region2: #{tpu_custom_call.1} parent=1 // pred_check
      _
    $region3: #{tpu_custom_call.1} parent=1 // pred_check_branch
      %18 = sbr.rel (0) target = $region5
    $region4: #{tpu_custom_call.1} parent=1 // pred_region
      %s20 = ssub.s32 64, 64
      %21 = vsyncadd [#allocation3], %s20
      %s23 = sshll.u32 [#allocation2], 4
      %s24 = int_to_ptr.vmem [resolvable:$true] %s23
      %26 = dma.hbm_to_vmem [thread:$0]  %s0, 64, %s24, [#allocation3]
    $region5: #{tpu_custom_call.1} parent=1 // pred_fallthru
      _
    // Predicated region
    $region6: #{tpu_custom_call.1} parent=1 // pred_check
      _
    $region7: #{tpu_custom_call.1} parent=1 // pred_check_branch
      %28 = sbr.rel (0) target = $region9
    $region8: #{tpu_custom_call.1} parent=1 // pred_region
      %s30 = ssub.s32 128, 128
      %31 = vsyncadd [#allocation6], %s30
      %s33 = sshll.u32 [#allocation5], 4
      %s34 = int_to_ptr.vmem [resolvable:$true] %s33
      %36 = dma.hbm_to_vmem [thread:$0]  %s1, 128, %s34, [#allocation6]
    $region9: #{tpu_custom_call.1} parent=1 // pred_fallthru
      _
    // Predicated region
    $region10: #{tpu_custom_call.1} parent=1 // pred_check
      _
    $region11: #{tpu_custom_call.1} parent=1 // pred_check_branch
      %38 = sbr.rel (0) target = $region13
    $region12: #{tpu_custom_call.1} parent=1 // pred_region
      %s40 = ssub.s32 128, 128
      %41 = vsyncadd [#allocation6], %s40
      %s43 = sshll.u32 [#allocation7], 4
      %s44 = int_to_ptr.vmem [resolvable:$true] %s43
      %46 = dma.hbm_to_vmem [thread:$0]  %s2, 128, %s44, [#allocation6]
    $region13: #{tpu_custom_call.1} parent=1 // pred_fallthru
      _
    // Predicated region
    $region14: #{tpu_custom_call.1} parent=1 // pred_check
      _
    $region15: #{tpu_custom_call.1} parent=1 // pred_check_branch
      %48 = sbr.rel (0) target = $region17
    $region16: #{tpu_custom_call.1} parent=1 // pred_region
      %s50 = ssub.s32 1024, 1024
      %51 = vsyncadd [#allocation9], %s50
      %s52 = sshll.u32 [#allocation8], 4
      %s53 = int_to_ptr.vmem [resolvable:$true] %s52
      %58 = dma.hbm_to_vmem [thread:$0]  %s3, 1024, %s53, [#allocation9], 128, 128, 8
    $region17: #{tpu_custom_call.1} parent=1 // pred_fallthru
      _
    // Predicated region
    $region18: #{tpu_custom_call.1} parent=1 // pred_check
      _
    $region19: #{tpu_custom_call.1} parent=1 // pred_check_branch
      %60 = sbr.rel (0) target = $region21
    $region20: #{tpu_custom_call.1} parent=1 // pred_region
      %s62 = ssub.s32 256, 256
      %63 = vsyncadd [#allocation9], %s62
      %s64 = sshll.u32 [#allocation10], 4
      %s65 = int_to_ptr.vmem [resolvable:$true] %s64
      %70 = dma.hbm_to_vmem [thread:$0]  %s4, 256, %s65, [#allocation9], 128, 128, 8
    $region21: #{tpu_custom_call.1} parent=1 // pred_fallthru
      _
    // Predicated region
    $region22: #{tpu_custom_call.1} parent=1 // pred_check
      _
    $region23: #{tpu_custom_call.1} parent=1 // pred_check_branch
      %72 = sbr.rel (0) target = $region25
    $region24: #{tpu_custom_call.1} parent=1 // pred_region
      %s74 = ssub.s32 256, 256
      %75 = vsyncadd [#allocation12], %s74
      %s76 = sshll.u32 [#allocation11], 4
      %s77 = int_to_ptr.vmem [resolvable:$true] %s76
      %82 = dma.hbm_to_vmem [thread:$0]  %s5, 256, %s77, [#allocation12], 128, 128, 8
    $region25: #{tpu_custom_call.1} parent=1 // pred_fallthru
      _
    // Predicated region
    $region26: #{tpu_custom_call.1} parent=1 // pred_check
      _
    $region27: #{tpu_custom_call.1} parent=1 // pred_check_branch
      %84 = sbr.rel (0) target = $region29
    $region28: #{tpu_custom_call.1} parent=1 // pred_region
      %s86 = ssub.s32 512, 512
      %87 = vsyncadd [#allocation12], %s86
      %s88 = sshll.u32 [#allocation13], 4
      %s89 = int_to_ptr.vmem [resolvable:$true] %s88
      %94 = dma.hbm_to_vmem [thread:$0]  %s6, 512, %s89, [#allocation12], 128, 128, 8
    $region29: #{tpu_custom_call.1} parent=1 // pred_fallthru
      _
    // Predicated region
    $region30: #{tpu_custom_call.1} parent=1 // pred_check
      _
    $region31: #{tpu_custom_call.1} parent=1 // pred_check_branch
      %96 = sbr.rel (0) target = $region33
    $region32: #{tpu_custom_call.1} parent=1 // pred_region
      %97 = dma.done [#allocation3], 64
    $region33: #{tpu_custom_call.1} parent=1 // pred_fallthru
      _
    // Predicated region
    $region34: #{tpu_custom_call.1} parent=1 // pred_check
      _
    $region35: #{tpu_custom_call.1} parent=1 // pred_check_branch
      %99 = sbr.rel (0) target = $region37
    $region36: #{tpu_custom_call.1} parent=1 // pred_region
      %100 = dma.done [#allocation6], 128
    $region37: #{tpu_custom_call.1} parent=1 // pred_fallthru
      _
    // Predicated region
    $region38: #{tpu_custom_call.1} parent=1 // pred_check
      _
    $region39: #{tpu_custom_call.1} parent=1 // pred_check_branch
      %102 = sbr.rel (0) target = $region41
    $region40: #{tpu_custom_call.1} parent=1 // pred_region
      %103 = dma.done [#allocation6], 128
    $region41: #{tpu_custom_call.1} parent=1 // pred_fallthru
      _
    // Predicated region
    $region42: #{tpu_custom_call.1} parent=1 // pred_check
      _
    $region43: #{tpu_custom_call.1} parent=1 // pred_check_branch
      %105 = sbr.rel (0) target = $region45
    $region44: #{tpu_custom_call.1} parent=1 // pred_region
      %106 = dma.done [#allocation9], 1024
    $region45: #{tpu_custom_call.1} parent=1 // pred_fallthru
      _
    // Predicated region
    $region46: #{tpu_custom_call.1} parent=1 // pred_check
      _
    $region47: #{tpu_custom_call.1} parent=1 // pred_check_branch
      %108 = sbr.rel (0) target = $region49
    $region48: #{tpu_custom_call.1} parent=1 // pred_region
      %109 = dma.done [#allocation9], 256
    $region49: #{tpu_custom_call.1} parent=1 // pred_fallthru
      _
    // Predicated region
    $region50: #{tpu_custom_call.1} parent=1 // pred_check
      _
    $region51: #{tpu_custom_call.1} parent=1 // pred_check_branch
      %111 = sbr.rel (0) target = $region53
    $region52: #{tpu_custom_call.1} parent=1 // pred_region
      %112 = dma.done [#allocation12], 256
    $region53: #{tpu_custom_call.1} parent=1 // pred_fallthru
      _
    // Predicated region
    $region54: #{tpu_custom_call.1} parent=1 // pred_check
      _
    $region55: #{tpu_custom_call.1} parent=1 // pred_check_branch
      %114 = sbr.rel (0) target = $region57
    $region56: #{tpu_custom_call.1} parent=1 // pred_region
      %115 = dma.done [#allocation12], 512
    $region57: #{tpu_custom_call.1} parent=1 // pred_fallthru
      _
    %v116 = vld [vmem:[#allocation2] sm:$0xf]
    %v117 = vunpack.c.l.bf16 %v116
    %v118 = vld [vmem:[#allocation8] sm:$0xff]
    %v119 = vld [vmem:[#allocation8 + $0x8] sm:$0xff]
    %v120 = vld [vmem:[#allocation8 + $0x10] sm:$0xff]
    %v121 = vld [vmem:[#allocation8 + $0x18] sm:$0xff]
    %v122 = vld [vmem:[#allocation8 + $0x20] sm:$0xff]
    %v123 = vld [vmem:[#allocation8 + $0x28] sm:$0xff]
    %v124 = vld [vmem:[#allocation8 + $0x30] sm:$0xff]
    %v125 = vld [vmem:[#allocation8 + $0x38] sm:$0xff]
    %vm126 = vcmask 523264
    %v128 = vsel %vm126, %v117, 0
    %130 = vmatprep.subr.mxu0 0.0
    %131 = vmatpush1.msra.mxu0 %v118
    %132 = vmatprep.subr.mxu0 0.0
    %133 = vmatpush1.msra.mxu0 %v119
    %134 = vmatprep.subr.mxu0 0.0
    %135 = vmatpush1.msra.mxu0 %v120
    %136 = vmatprep.subr.mxu0 0.0
    %137 = vmatpush1.msra.mxu0 %v121
    %138 = vmatprep.subr.mxu0 0.0
    %139 = vmatpush1.msra.mxu0 %v122
    %140 = vmatprep.subr.mxu0 0.0
    %141 = vmatpush1.msra.mxu0 %v123
    %142 = vmatprep.subr.mxu0 0.0
    %143 = vmatpush1.msra.mxu0 %v124
    %144 = vmatprep.subr.mxu0 0.0
    %145 = vmatpush1.msra.mxu0 %v125
    %146 = vmatprep.subr.mxu0 0.0
    %147 = vmatpush1.msra.mxu0 0.0
    %148 = vmatprep.subr.mxu0 0.0
    %149 = vmatpush1.msra.mxu0 0.0
    %150 = vmatprep.subr.mxu0 0.0
    %151 = vmatpush1.msra.mxu0 0.0
    %152 = vmatprep.subr.mxu0 0.0
    %153 = vmatpush1.msra.mxu0 0.0
    %154 = vmatprep.subr.mxu0 0.0
    %155 = vmatpush1.msra.mxu0 0.0
    %156 = vmatprep.subr.mxu0 0.0
    %157 = vmatpush1.msra.mxu0 0.0
    %158 = vmatprep.subr.mxu0 0.0
    %159 = vmatpush1.msra.mxu0 0.0
    %160 = vmatprep.subr.mxu0 0.0
    %161 = vmatpush1.msra.mxu0 0.0
    %162 = vmatprep.subr.mxu0 0.0
    %163 = vmatpush1.msra.mxu0 0.0
    %164 = vmatprep.subr.mxu0 0.0
    %165 = vmatpush1.msra.mxu0 0.0
    %166 = vmatprep.subr.mxu0 0.0
    %167 = vmatpush1.msra.mxu0 0.0
    %168 = vmatprep.subr.mxu0 0.0
    %169 = vmatpush1.msra.mxu0 0.0
    %170 = vmatprep.subr.mxu0 0.0
    %171 = vmatpush1.msra.mxu0 0.0
    %172 = vmatprep.subr.mxu0 0.0
    %173 = vmatpush1.msra.mxu0 0.0
    %174 = vmatprep.subr.mxu0 0.0
    %175 = vmatpush1.msra.mxu0 0.0
    %176 = vmatprep.subr.mxu0 0.0
    %177 = vmatpush1.msra.mxu0 0.0
    %178 = vmatprep.subr.mxu0 0.0
    %179 = vmatpush1.msra.mxu0 0.0
    %180 = vmatprep.subr.mxu0 0.0
    %181 = vmatpush1.msra.mxu0 0.0
    %182 = vmatprep.subr.mxu0 0.0
    %183 = vmatpush1.msra.mxu0 0.0
    %184 = vmatprep.subr.mxu0 0.0
    %185 = vmatpush1.msra.mxu0 0.0
    %186 = vmatprep.subr.mxu0 0.0
    %187 = vmatpush1.msra.mxu0 0.0
    %188 = vmatprep.subr.mxu0 0.0
    %189 = vmatpush1.msra.mxu0 0.0
    %190 = vmatprep.subr.mxu0 0.0
    %191 = vmatpush1.msra.mxu0 0.0
    %192 = vmatprep.subr.mxu0 0.0
    %193 = vmatpush1.msra.mxu0 0.0
    %194 = vmatprep.mubr.f32.mxu0 0.0
    %195 = vmatmul.mubr.f32.gmra.mrb[0].mxu0 %v128
    %v196 = vpop.f32.mrb[0].mxu0
    %v197 = vadd.f32 0.0, %v196
    %v198 = vpop.f32.mrb[0].mxu0
    %199 = vdwg.mxu0
    %v200 = vld [vmem:[#allocation7] sm:$0xff]
    %202 = vset.pattern.permute.xlu0 0
    %203 = vperm.xlu0 %202, %v200
    %v204 = vpop.permute.xlu0 %203
    %v206 = vmul.f32 %v197, %v204
    %v207 = vld [vmem:[#allocation5] sm:$0xff]
    %v208 = vld [vmem:[#allocation10] sm:$0xff]
    %v209 = vld [vmem:[#allocation10 + $0x8] sm:$0xff]
    %v210 = vld [vmem:[#allocation11] sm:$0xff]
    %v211 = vld [vmem:[#allocation11 + $0x8] sm:$0xff]
    %vm212 = vcmask 130048
    %v214 = vsel %vm212, %v206, 0
    %216 = vmatprep.subr.mxu0 0.0
    %217 = vmatpush1.msra.mxu0 %v210
    %218 = vmatprep.subr.mxu0 0.0
    %219 = vmatpush1.msra.mxu0 %v211
    %220 = vmatprep.subr.mxu0 0.0
    %221 = vmatpush1.msra.mxu0 0.0
    %222 = vmatprep.subr.mxu0 0.0
    %223 = vmatpush1.msra.mxu0 0.0
    %224 = vmatprep.subr.mxu0 0.0
    %225 = vmatpush1.msra.mxu0 0.0
    %226 = vmatprep.subr.mxu0 0.0
    %227 = vmatpush1.msra.mxu0 0.0
    %228 = vmatprep.subr.mxu0 0.0
    %229 = vmatpush1.msra.mxu0 0.0
    %230 = vmatprep.subr.mxu0 0.0
    %231 = vmatpush1.msra.mxu0 0.0
    %232 = vmatprep.subr.mxu0 0.0
    %233 = vmatpush1.msra.mxu0 0.0
    %234 = vmatprep.subr.mxu0 0.0
    %235 = vmatpush1.msra.mxu0 0.0
    %236 = vmatprep.subr.mxu0 0.0
    %237 = vmatpush1.msra.mxu0 0.0
    %238 = vmatprep.subr.mxu0 0.0
    %239 = vmatpush1.msra.mxu0 0.0
    %240 = vmatprep.subr.mxu0 0.0
    %241 = vmatpush1.msra.mxu0 0.0
    %242 = vmatprep.subr.mxu0 0.0
    %243 = vmatpush1.msra.mxu0 0.0
    %244 = vmatprep.subr.mxu0 0.0
    %245 = vmatpush1.msra.mxu0 0.0
    %246 = vmatprep.subr.mxu0 0.0
    %247 = vmatpush1.msra.mxu0 0.0
    %248 = vmatprep.subr.mxu0 0.0
    %249 = vmatpush1.msra.mxu0 0.0
    %250 = vmatprep.subr.mxu0 0.0
    %251 = vmatpush1.msra.mxu0 0.0
    %252 = vmatprep.subr.mxu0 0.0
    %253 = vmatpush1.msra.mxu0 0.0
    %254 = vmatprep.subr.mxu0 0.0
    %255 = vmatpush1.msra.mxu0 0.0
    %256 = vmatprep.subr.mxu0 0.0
    %257 = vmatpush1.msra.mxu0 0.0
    %258 = vmatprep.subr.mxu0 0.0
    %259 = vmatpush1.msra.mxu0 0.0
    %260 = vmatprep.subr.mxu0 0.0
    %261 = vmatpush1.msra.mxu0 0.0
    %262 = vmatprep.subr.mxu0 0.0
    %263 = vmatpush1.msra.mxu0 0.0
    %264 = vmatprep.subr.mxu0 0.0
    %265 = vmatpush1.msra.mxu0 0.0
    %266 = vmatprep.subr.mxu0 0.0
    %267 = vmatpush1.msra.mxu0 0.0
    %268 = vmatprep.subr.mxu0 0.0
    %269 = vmatpush1.msra.mxu0 0.0
    %270 = vmatprep.subr.mxu0 0.0
    %271 = vmatpush1.msra.mxu0 0.0
    %272 = vmatprep.subr.mxu0 0.0
    %273 = vmatpush1.msra.mxu0 0.0
    %274 = vmatprep.subr.mxu0 0.0
    %275 = vmatpush1.msra.mxu0 0.0
    %276 = vmatprep.subr.mxu0 0.0
    %277 = vmatpush1.msra.mxu0 0.0
    %278 = vmatprep.subr.mxu0 0.0
    %279 = vmatpush1.msra.mxu0 0.0
    %280 = vmatprep.mubr.f32.mxu0 0.0
    %281 = vmatmul.mubr.f32.gmra.mrb[0].mxu0 %v214
    %v282 = vpop.f32.mrb[0].mxu0
    %v283 = vadd.f32 0.0, %v282
    %v284 = vpop.f32.mrb[0].mxu0
    %285 = vdwg.mxu0
    %v287 = vsel %vm212, %v207, 0
    %289 = vmatprep.subr.mxu0 0.0
    %290 = vmatpush1.msra.mxu0 %v208
    %291 = vmatprep.subr.mxu0 0.0
    %292 = vmatpush1.msra.mxu0 %v209
    %293 = vmatprep.subr.mxu0 0.0
    %294 = vmatpush1.msra.mxu0 0.0
    %295 = vmatprep.subr.mxu0 0.0
    %296 = vmatpush1.msra.mxu0 0.0
    %297 = vmatprep.subr.mxu0 0.0
    %298 = vmatpush1.msra.mxu0 0.0
    %299 = vmatprep.subr.mxu0 0.0
    %300 = vmatpush1.msra.mxu0 0.0
    %301 = vmatprep.subr.mxu0 0.0
    %302 = vmatpush1.msra.mxu0 0.0
    %303 = vmatprep.subr.mxu0 0.0
    %304 = vmatpush1.msra.mxu0 0.0
    %305 = vmatprep.subr.mxu0 0.0
    %306 = vmatpush1.msra.mxu0 0.0
    %307 = vmatprep.subr.mxu0 0.0
    %308 = vmatpush1.msra.mxu0 0.0
    %309 = vmatprep.subr.mxu0 0.0
    %310 = vmatpush1.msra.mxu0 0.0
    %311 = vmatprep.subr.mxu0 0.0
    %312 = vmatpush1.msra.mxu0 0.0
    %313 = vmatprep.subr.mxu0 0.0
    %314 = vmatpush1.msra.mxu0 0.0
    %315 = vmatprep.subr.mxu0 0.0
    %316 = vmatpush1.msra.mxu0 0.0
    %317 = vmatprep.subr.mxu0 0.0
    %318 = vmatpush1.msra.mxu0 0.0
    %319 = vmatprep.subr.mxu0 0.0
    %320 = vmatpush1.msra.mxu0 0.0
    %321 = vmatprep.subr.mxu0 0.0
    %322 = vmatpush1.msra.mxu0 0.0
    %323 = vmatprep.subr.mxu0 0.0
    %324 = vmatpush1.msra.mxu0 0.0
    %325 = vmatprep.subr.mxu0 0.0
    %326 = vmatpush1.msra.mxu0 0.0
    %327 = vmatprep.subr.mxu0 0.0
    %328 = vmatpush1.msra.mxu0 0.0
    %329 = vmatprep.subr.mxu0 0.0
    %330 = vmatpush1.msra.mxu0 0.0
    %331 = vmatprep.subr.mxu0 0.0
    %332 = vmatpush1.msra.mxu0 0.0
    %333 = vmatprep.subr.mxu0 0.0
    %334 = vmatpush1.msra.mxu0 0.0
    %335 = vmatprep.subr.mxu0 0.0
    %336 = vmatpush1.msra.mxu0 0.0
    %337 = vmatprep.subr.mxu0 0.0
    %338 = vmatpush1.msra.mxu0 0.0
    %339 = vmatprep.subr.mxu0 0.0
    %340 = vmatpush1.msra.mxu0 0.0
    %341 = vmatprep.subr.mxu0 0.0
    %342 = vmatpush1.msra.mxu0 0.0
    %343 = vmatprep.subr.mxu0 0.0
    %344 = vmatpush1.msra.mxu0 0.0
    %345 = vmatprep.subr.mxu0 0.0
    %346 = vmatpush1.msra.mxu0 0.0
    %347 = vmatprep.subr.mxu0 0.0
    %348 = vmatpush1.msra.mxu0 0.0
    %349 = vmatprep.subr.mxu0 0.0
    %350 = vmatpush1.msra.mxu0 0.0
    %351 = vmatprep.subr.mxu0 0.0
    %352 = vmatpush1.msra.mxu0 0.0
    %353 = vmatprep.mubr.f32.mxu0 0.0
    %354 = vmatmul.mubr.f32.gmra.mrb[0].mxu0 %v287
    %v355 = vpop.f32.mrb[0].mxu0
    %v356 = vadd.f32 %v283, %v355
    %v357 = vpop.f32.mrb[0].mxu0
    %358 = vdwg.mxu0
    %v359 = vmax.f32 %v356, 0.0
    %v360 = vld [vmem:[#allocation13] sm:$0xff]
    %v361 = vld [vmem:[#allocation13 + $0x8] sm:$0xff]
    %v362 = vld [vmem:[#allocation13 + $0x10] sm:$0xff]
    %v363 = vld [vmem:[#allocation13 + $0x18] sm:$0xff]
    %vm364 = vcmask 261120
    %v366 = vsel %vm364, %v359, 0
    %368 = vmatprep.subr.mxu0 0.0
    %369 = vmatpush1.msra.mxu0 %v360
    %370 = vmatprep.subr.mxu0 0.0
    %371 = vmatpush1.msra.mxu0 %v361
    %372 = vmatprep.subr.mxu0 0.0
    %373 = vmatpush1.msra.mxu0 %v362
    %374 = vmatprep.subr.mxu0 0.0
    %375 = vmatpush1.msra.mxu0 %v363
    %376 = vmatprep.subr.mxu0 0.0
    %377 = vmatpush1.msra.mxu0 0.0
    %378 = vmatprep.subr.mxu0 0.0
    %379 = vmatpush1.msra.mxu0 0.0
    %380 = vmatprep.subr.mxu0 0.0
    %381 = vmatpush1.msra.mxu0 0.0
    %382 = vmatprep.subr.mxu0 0.0
    %383 = vmatpush1.msra.mxu0 0.0
    %384 = vmatprep.subr.mxu0 0.0
    %385 = vmatpush1.msra.mxu0 0.0
    %386 = vmatprep.subr.mxu0 0.0
    %387 = vmatpush1.msra.mxu0 0.0
    %388 = vmatprep.subr.mxu0 0.0
    %389 = vmatpush1.msra.mxu0 0.0
    %390 = vmatprep.subr.mxu0 0.0
    %391 = vmatpush1.msra.mxu0 0.0
    %392 = vmatprep.subr.mxu0 0.0
    %393 = vmatpush1.msra.mxu0 0.0
    %394 = vmatprep.subr.mxu0 0.0
    %395 = vmatpush1.msra.mxu0 0.0
    %396 = vmatprep.subr.mxu0 0.0
    %397 = vmatpush1.msra.mxu0 0.0
    %398 = vmatprep.subr.mxu0 0.0
    %399 = vmatpush1.msra.mxu0 0.0
    %400 = vmatprep.subr.mxu0 0.0
    %401 = vmatpush1.msra.mxu0 0.0
    %402 = vmatprep.subr.mxu0 0.0
    %403 = vmatpush1.msra.mxu0 0.0
    %404 = vmatprep.subr.mxu0 0.0
    %405 = vmatpush1.msra.mxu0 0.0
    %406 = vmatprep.subr.mxu0 0.0
    %407 = vmatpush1.msra.mxu0 0.0
    %408 = vmatprep.subr.mxu0 0.0
    %409 = vmatpush1.msra.mxu0 0.0
    %410 = vmatprep.subr.mxu0 0.0
    %411 = vmatpush1.msra.mxu0 0.0
    %412 = vmatprep.subr.mxu0 0.0
    %413 = vmatpush1.msra.mxu0 0.0
    %414 = vmatprep.subr.mxu0 0.0
    %415 = vmatpush1.msra.mxu0 0.0
    %416 = vmatprep.subr.mxu0 0.0
    %417 = vmatpush1.msra.mxu0 0.0
    %418 = vmatprep.subr.mxu0 0.0
    %419 = vmatpush1.msra.mxu0 0.0
    %420 = vmatprep.subr.mxu0 0.0
    %421 = vmatpush1.msra.mxu0 0.0
    %422 = vmatprep.subr.mxu0 0.0
    %423 = vmatpush1.msra.mxu0 0.0
    %424 = vmatprep.subr.mxu0 0.0
    %425 = vmatpush1.msra.mxu0 0.0
    %426 = vmatprep.subr.mxu0 0.0
    %427 = vmatpush1.msra.mxu0 0.0
    %428 = vmatprep.subr.mxu0 0.0
    %429 = vmatpush1.msra.mxu0 0.0
    %430 = vmatprep.subr.mxu0 0.0
    %431 = vmatpush1.msra.mxu0 0.0
    %432 = vmatprep.mubr.f32.mxu0 0.0
    %433 = vmatmul.mubr.f32.gmra.mrb[0].mxu0 %v366
    %v434 = vpop.f32.mrb[0].mxu0
    %v435 = vadd.f32 0.0, %v434
    %v436 = vpop.f32.mrb[0].mxu0
    %437 = vdwg.mxu0
    %438 = vst [vmem:[#allocation14] sm:$0xff] %v435
    // Predicated region
    $region58: #{tpu_custom_call.1} parent=1 // pred_check
      _
    $region59: #{tpu_custom_call.1} parent=1 // pred_check_branch
      %440 = sbr.rel (0) target = $region61
    $region60: #{tpu_custom_call.1} parent=1 // pred_region
      %s442 = ssub.s32 128, 128
      %443 = vsyncadd [#allocation4], %s442
      %s445 = sshll.u32 [#allocation14], 4
      %s446 = int_to_ptr.vmem [resolvable:$true] %s445
      %448 = dma.vmem_to_hbm [thread:$0]  %s446, 128, %s7, [#allocation4]
    $region61: #{tpu_custom_call.1} parent=1 // pred_fallthru
      _
    // Predicated region
    $region62: #{tpu_custom_call.1} parent=1 // pred_check
      _
    $region63: #{tpu_custom_call.1} parent=1 // pred_check_branch
      %450 = sbr.rel (0) target = $region65
    $region64: #{tpu_custom_call.1} parent=1 // pred_region
      %451 = dma.done [#allocation4], 128
    $region65: #{tpu_custom_call.1} parent=1 // pred_fallthru
      _
    %452 = vsyncpa [#allocation3], 1
    %453 = vsyncpa [#allocation6], 1
    %454 = vsyncpa [#allocation9], 1
    %455 = vsyncpa [#allocation12], 1
    %456 = vsyncpa [#allocation4], 1

</llo_original>
